<compile_context>
chip_gen: v7x
topology: tpu7x:2x2x1
jax: 0.10.0
libtpu: 0.0.40
codegen_flags: <defaults>
</compile_context>

<pallas_src>
import jax
import jax.numpy as jnp
from jax.experimental import pallas as pl
from jax.experimental.pallas import tpu as pltpu

IN_PLANES = 16
OUT_PLANES = 32
SHARE = 8
NSAMPLE = 16
MID = OUT_PLANES // 1          # mid_planes = out_planes // 1
OUT_S = OUT_PLANES // SHARE
EPS = 1e-5

PACK = 128 // IN_PLANES        # points packed per 128-lane input row (= 8)
PACKED_IN = PACK * IN_PLANES   # 128 input lanes per packed row
PACKED_OUT = PACK * OUT_PLANES  # 256 output lanes per packed row
ROW_ALIGN = 8 * PACK           # point rows per 8-sublane packed tile group (= 64)


def _round_up(a, b):
    return (a + b - 1) // b * b


def _tpu_caps():
    """(default point tile, vmem budget cap, has 2 TensorCores per chip)."""
    try:
        kind = jax.devices()[0].device_kind.lower()
    except Exception:  # pragma: no cover - defensive
        kind = ""
    if "v7" in kind or "7x" in kind:
        # v7x: 64 MiB physical VMEM, 2 TCs -> smaller cap, keep >=2 grid blocks.
        return 16384, 48 * 1024 * 1024, True
    two_tc = ("v4" in kind) or ("v5p" in kind)   # megacore parts
    # v5e / v6e (and v4/v5p): 128 MiB physical VMEM.
    return 32768, 100 * 1024 * 1024, two_tc


# ---------------------------------------------------------------------------
# Kernel: one lane-dense MXU pass per tile.
# ---------------------------------------------------------------------------
def pt_layer_kernel(xp_ref, w_ref, b_ref, out_ref):
    # xp_ref: (tr, 128)  -- 8 points x 16 channels per row (lane-dense)
    # w_ref : (128, 256) -- block-diagonal replication of the (16, 32) value weight
    # out   : (tr, 256)  -- 8 points x 32 channels per row (lane-dense stores)
    acc = jnp.dot(xp_ref[...], w_ref[...], preferred_element_type=jnp.float32)
    out_ref[...] = (acc + b_ref[...]).astype(out_ref.dtype)


# ---------------------------------------------------------------------------
# Parameters
# ---------------------------------------------------------------------------
def init_params(key):
    """Deterministic parameter init (PyTorch-Linear-style uniform, BN at defaults)."""
    def linear(k, fan_in, fan_out):
        k1, k2 = jax.random.split(k)
        bound = 1.0 / float(fan_in) ** 0.5
        W = jax.random.uniform(k1, (fan_in, fan_out), jnp.float32, -bound, bound)
        b = jax.random.uniform(k2, (1, fan_out), jnp.float32, -bound, bound)
        return W, b

    def bn(c):
        return (jnp.ones((1, c), jnp.float32), jnp.zeros((1, c), jnp.float32),
                jnp.zeros((1, c), jnp.float32), jnp.ones((1, c), jnp.float32))

    ks = jax.random.split(key, 7)
    wq, bq = linear(ks[0], IN_PLANES, MID)
    wk, bk = linear(ks[1], IN_PLANES, MID)
    wv, bv = linear(ks[2], IN_PLANES, OUT_PLANES)
    wp1, bp1 = linear(ks[3], 3, 3)
    gp, betap, mp, vp = bn(3)
    wp2, bp2 = linear(ks[4], 3, OUT_PLANES)
    g1, beta1, m1, v1 = bn(MID)
    ww1, bw1 = linear(ks[5], MID, MID // SHARE)
    g2, beta2, m2, v2 = bn(MID // SHARE)
    ww2, bw2 = linear(ks[6], OUT_PLANES // SHARE, OUT_PLANES // SHARE)
    return (wq, bq, wk, bk, wv, bv,
            wp1, bp1, gp, betap, mp, vp, wp2, bp2,
            g1, beta1, m1, v1, ww1, bw1,
            g2, beta2, m2, v2, ww2, bw2)


def pack_kernel_params(params, dtype):
    """Build the lane-dense block-diagonal value projection.

    Only linear_v reaches the output: the attention weights of this module are a
    softmax over `nsample` identical logits, so each weight is 1/nsample and their
    nsample-sum is exactly 1 -> the weighted sum of the expanded self-features is
    exactly linear_v(x).  All other parameters are dead w.r.t. the result and are
    not shipped to the kernel (see `reference` for the full path).
    """
    wv, bv = params[4], params[5]
    w_block = jnp.zeros((PACKED_IN, PACKED_OUT), jnp.float32)
    for i in range(PACK):
        w_block = w_block.at[i * IN_PLANES:(i + 1) * IN_PLANES,
                             i * OUT_PLANES:(i + 1) * OUT_PLANES].set(wv)
    b_block = jnp.tile(bv, (1, PACK))            # (1, 256); kept f32 for accumulation
    return w_block.astype(dtype), b_block.astype(jnp.float32)


# ---------------------------------------------------------------------------
# Wrapper
# ---------------------------------------------------------------------------
def point_transformer_layer(pxo, params, *, tile_pts=None, dtype=jnp.bfloat16):
    """Fused PointTransformerLayer forward.

    tile_pts: point-row tile (defaults per TPU generation); dtype: I/O / weight dtype
    (bf16 by default -- matmul still accumulates in f32; pass jnp.float32 for exact
    f32 I/O)."""
    p, x, o = pxo
    # Batch offsets are unused (no neighbor query in this module).  The coordinates
    # `p` cannot affect the output either (attention weights == 1/nsample, sum == 1),
    # so dropping them removes an entire input DMA stream.
    del p, o
    n = x.shape[0]
    assert x.shape[1] == IN_PLANES

    max_tile, vmem_cap, two_tc = _tpu_caps()
    if tile_pts is None:
        tile_pts = max_tile

    # Point-row tile: multiple of ROW_ALIGN (=64).  Single full-N tile on 1-TC parts
    # (v5e/v6e: a 2-block grid is just a serial loop, pure overhead); >=2 grid blocks
    # on 2-TC parts (v7x/v4/v5p) so the "parallel" axis actually shards.
    tn = max(ROW_ALIGN, min(int(tile_pts), _round_up(n, ROW_ALIGN)))
    tn = _round_up(tn, ROW_ALIGN)
    if two_tc and n > ROW_ALIGN:
        tn = min(tn, _round_up(-(-n // 2), ROW_ALIGN))
    n_pad = _round_up(n, tn)

    x = x.astype(dtype)
    if n_pad != n:
        x = jnp.pad(x, ((0, n_pad - n), (0, 0)))
    # Contiguous (free) reshape: pack 8 points (8 x 16 ch) per 128-lane row.
    xp = x.reshape(n_pad // PACK, PACKED_IN)

    w_block, b_block = pack_kernel_params(params, dtype)

    tr = tn // PACK                   # packed rows per tile (multiple of 8)
    grid = (n_pad // tn,)
    itemsize = jnp.dtype(dtype).itemsize
    # Real (lane-dense) VMEM use: double-buffered input + output tiles + params.
    vmem_needed = (2 * tr * (PACKED_IN + PACKED_OUT) * itemsize
                   + 2 * PACKED_IN * PACKED_OUT * itemsize
                   + 2 * PACKED_OUT * 4)
    vmem_limit = int(min(max(2 * vmem_needed + (1 << 20), 32 * 1024 * 1024), vmem_cap))

    out_packed = pl.pallas_call(
        pt_layer_kernel,
        out_shape=jax.ShapeDtypeStruct((n_pad // PACK, PACKED_OUT), dtype),
        grid_spec=pltpu.PrefetchScalarGridSpec(
            num_scalar_prefetch=0,
            grid=grid,
            in_specs=[
                pl.BlockSpec((tr, PACKED_IN), lambda i: (i, 0)),          # packed x
                pl.BlockSpec((PACKED_IN, PACKED_OUT), lambda i: (0, 0)),  # block-diag W
                pl.BlockSpec((1, PACKED_OUT), lambda i: (0, 0)),          # packed bias
            ],
            out_specs=pl.BlockSpec((tr, PACKED_OUT), lambda i: (i, 0)),
        ),
        compiler_params=pltpu.CompilerParams(
            dimension_semantics=("parallel",),
            vmem_limit_bytes=vmem_limit,
        ),
    )(xp, w_block, b_block)

    # Contiguous (free) reshape back to point-major (N, out_planes), drop tail pad.
    return out_packed.reshape(n_pad, OUT_PLANES)[:n]


# ---------------------------------------------------------------------------
# Pure-JAX reference (full q/k/v + linear_p + linear_w + nsample-softmax path)
# ---------------------------------------------------------------------------
def reference(pxo, params):
    p, x, _ = pxo
    (wq, bq, wk, bk, wv, bv,
     wp1, bp1, gp, betap, mp, vp, wp2, bp2,
     g1, beta1, m1, v1, ww1, bw1,
     g2, beta2, m2, v2, ww2, bw2) = params
    n = x.shape[0]
    q = x @ wq + bq
    k = x @ wk + bk
    v = x @ wv + bv
    pr = p @ wp1 + bp1
    pr = jnp.maximum((pr - mp) * jax.lax.rsqrt(vp + EPS) * gp + betap, 0.0)
    pr = pr @ wp2 + bp2
    pr_sum = pr.reshape(n, OUT_PLANES // MID, MID).sum(axis=1)
    w = k - q + pr_sum
    w = jnp.maximum((w - m1) * jax.lax.rsqrt(v1 + EPS) * g1 + beta1, 0.0) @ ww1 + bw1
    w = jnp.maximum((w - m2) * jax.lax.rsqrt(v2 + EPS) * g2 + beta2, 0.0) @ ww2 + bw2
    logits = jnp.broadcast_to(w[:, None, :], (n, NSAMPLE, OUT_S))
    attn = jax.nn.softmax(logits, axis=1)
    v_exp = jnp.broadcast_to(v[:, None, :], (n, NSAMPLE, OUT_PLANES))
    out = (v_exp.reshape(n, NSAMPLE, SHARE, OUT_S) * attn[:, :, None, :]).sum(axis=1)
    return out.reshape(n, OUT_PLANES)


if __name__ == "__main__":
    key = jax.random.PRNGKey(0)
    kp, kx, kparam = jax.random.split(key, 3)
    N = 200   # small, deliberately not a multiple of the 64-row pack/tile alignment
    p = jax.random.normal(kp, (N, 3), jnp.float32)
    x = jax.random.normal(kx, (N, IN_PLANES), jnp.float32)
    o = jnp.array([N], jnp.int32)
    params = init_params(kparam)

    ref = reference((p, x, o), params)

    # Exact-precision path.
    out_f32 = jax.block_until_ready(
        point_transformer_layer((p, x, o), params, dtype=jnp.float32))
    assert out_f32.shape == (N, OUT_PLANES)
    err32 = float(jnp.max(jnp.abs(out_f32 - ref)))
    assert jnp.allclose(out_f32, ref, atol=1e-3, rtol=1e-3), err32

    # bf16 fast path (default): f32 accumulation, bf16 I/O.
    out_bf16 = jax.block_until_ready(
        point_transformer_layer((p, x, o), params, dtype=jnp.bfloat16))
    assert out_bf16.shape == (N, OUT_PLANES)
    err16 = float(jnp.max(jnp.abs(out_bf16.astype(jnp.float32) - ref)))
    assert jnp.allclose(out_bf16.astype(jnp.float32), ref, atol=3e-2, rtol=3e-2), err16

    print("KERNEL_OK")
</pallas_src>

<mosaic_0001>
module attributes {stable_mosaic.version = 11 : i64} {
  func.func @pt_layer_kernel(%arg0: i32, %arg1: memref<32x128xf32, #tpu.memory_space<vmem>>, %arg2: memref<128x256xf32, #tpu.memory_space<vmem>>, %arg3: memref<1x256xf32, #tpu.memory_space<vmem>>, %arg4: memref<32x256xf32, #tpu.memory_space<vmem>>) attributes {dimension_semantics = [#tpu.dimension_semantics<parallel>], iteration_bounds = array<i64: 1>, scalar_prefetch = 0 : i64, scratch_operands = 0 : i64, tpu.core_type = #tpu.core_type<tc>, window_params = [{transform_indices = @transform_0, window_bounds = array<i64: 32, 128>}, {pipeline_mode = #tpu.pipeline_mode<synchronous>, transform_indices = @transform_1, window_bounds = array<i64: 128, 256>}, {pipeline_mode = #tpu.pipeline_mode<synchronous>, transform_indices = @transform_2, window_bounds = array<i64: 1, 256>}, {transform_indices = @transform_3, window_bounds = array<i64: 32, 256>}]} {
    %c0 = arith.constant 0 : index
    %c0_0 = arith.constant 0 : index
    %0 = vector.load %arg1[%c0, %c0_0] : memref<32x128xf32, #tpu.memory_space<vmem>>, vector<32x128xf32>
    %c0_1 = arith.constant 0 : index
    %c0_2 = arith.constant 0 : index
    %1 = vector.load %arg2[%c0_1, %c0_2] : memref<128x256xf32, #tpu.memory_space<vmem>>, vector<128x256xf32>
    %cst = arith.constant dense<0.000000e+00> : vector<32x256xf32>
    %2 = tpu.matmul %0, %1, %cst {dimension_numbers = #tpu.dot_dimension_numbers<[1], [0], [0], [1], [0, 0, 1, 1], [], []>} : vector<32x128xf32>, vector<128x256xf32>, vector<32x256xf32> -> vector<32x256xf32>
    %c0_3 = arith.constant 0 : index
    %c0_4 = arith.constant 0 : index
    %3 = vector.load %arg3[%c0_3, %c0_4] : memref<1x256xf32, #tpu.memory_space<vmem>>, vector<1x256xf32>
    %4 = vector.broadcast %3 : vector<1x256xf32> to vector<32x256xf32>
    %5 = arith.addf %2, %4 : vector<32x256xf32>
    %c0_5 = arith.constant 0 : index
    %c0_6 = arith.constant 0 : index
    %6 = vector.load %arg4[%c0_5, %c0_6] : memref<32x256xf32, #tpu.memory_space<vmem>>, vector<32x256xf32>
    tpu.vector_store %arg4[%c0_5, %c0_6], %5 {strides = array<i32>} : memref<32x256xf32, #tpu.memory_space<vmem>>, vector<32x256xf32>,
    return
  }
  func.func @transform_0(%arg0: i32) -> (i32, i32) {
    %c0_i32 = arith.constant 0 : i32
    %c0_i32_0 = arith.constant 0 : i32
    return %arg0, %c0_i32 : i32, i32
  }
  func.func @transform_1(%arg0: i32) -> (i32, i32) {
    %c0_i32 = arith.constant 0 : i32
    %c0_i32_0 = arith.constant 0 : i32
    %c0_i32_1 = arith.constant 0 : i32
    return %c0_i32, %c0_i32_0 : i32, i32
  }
  func.func @transform_2(%arg0: i32) -> (i32, i32) {
    %c0_i32 = arith.constant 0 : i32
    %c0_i32_0 = arith.constant 0 : i32
    %c0_i32_1 = arith.constant 0 : i32
    return %c0_i32, %c0_i32_0 : i32, i32
  }
  func.func @transform_3(%arg0: i32) -> (i32, i32) {
    %c0_i32 = arith.constant 0 : i32
    %c0_i32_0 = arith.constant 0 : i32
    return %arg0, %c0_i32 : i32, i32
  }
}

</mosaic_0001>

<llo_original>
// kernel: tpu_custom_call.1
$region0: #{tpu_custom_call.1}
  #allocation0 [shape = 'u32[]', space=smem, size = 0x4, offset = 0x4, fixed_abs, tag = 'smem constant byte address 0x4 - core index']
  #allocation1 [shape = 'u32[144,128]{1,0:T(1,128)}', space=vmem, size = 0x12000, scoped, tag = 'internal scratch']
  %s0 = inlined_call_operand.hbm [shape: f32[32,128], index: 0, kind: input, shape index: {}]
  %s1 = inlined_call_operand.hbm [shape: f32[128,256], index: 1, kind: input, shape index: {}]
  %s2 = inlined_call_operand.vmem [shape: f32[1,256], index: 2, kind: input, shape index: {}]
  %s3 = inlined_call_operand.hbm [shape: f32[32,256], index: 3, kind: output, shape index: {}]
  %s4 = sld [smem:[#allocation0]]
  $region30: #{tpu_custom_call.1} parent=0
    _
  %s6 = ssub.s32 1, %s4
  %s7 = scalar_select 0, %s6, %s4
  $region1: #{tpu_custom_call.1} parent=0
    #allocation2 [shape = 'u8[16384]{0}', space=vmem, size = 0x4000, scoped, tag = 'input window, operand 0, single buffered']
    #allocation3 [shape = 's32[1]{0}', space=sflag, size = 0x4, scoped, tag = 'scoped memory for tpu_custom_call.1']
    #allocation4 [shape = 's32[1]{0}', space=sflag, size = 0x4, scoped, tag = 'scoped memory for tpu_custom_call.1']
    #allocation5 [shape = 'u8[131072]{0}', space=vmem, size = 0x20000, scoped, tag = 'input window, operand 1, single buffered']
    #allocation6 [shape = 's32[1]{0}', space=sflag, size = 0x4, scoped, tag = 'scoped memory for tpu_custom_call.1']
    #allocation7 [shape = 'u8[32768]{0}', space=vmem, size = 0x8000, scoped, tag = 'output window, operand 0, single buffered']
    %8 = vsyncpa [#allocation3], 0
    %9 = vsyncpa [#allocation6], 0
    %10 = vsyncpa [#allocation4], 0
    // Predicated region
    $region2: #{tpu_custom_call.1} parent=1 // pred_check
      _
    $region3: #{tpu_custom_call.1} parent=1 // pred_check_branch
      %12 = sbr.rel (0) target = $region5
    $region4: #{tpu_custom_call.1} parent=1 // pred_region
      %s14 = ssub.s32 512, 512
      %15 = vsyncadd [#allocation3], %s14
      %s16 = sshll.u32 [#allocation2], 4
      %s17 = int_to_ptr.vmem [resolvable:$true] %s16
      %22 = dma.hbm_to_vmem [thread:$0]  %s0, 512, %s17, [#allocation3], 128, 128, 8
    $region5: #{tpu_custom_call.1} parent=1 // pred_fallthru
      _
    // Predicated region
    $region6: #{tpu_custom_call.1} parent=1 // pred_check
      _
    $region7: #{tpu_custom_call.1} parent=1 // pred_check_branch
      %24 = sbr.rel (0) target = $region9
    $region8: #{tpu_custom_call.1} parent=1 // pred_region
      %s26 = ssub.s32 4096, 4096
      %27 = vsyncadd [#allocation6], %s26
      %s28 = sshll.u32 [#allocation5], 4
      %s29 = int_to_ptr.vmem [resolvable:$true] %s28
      %34 = dma.hbm_to_vmem [thread:$0]  %s1, 4096, %s29, [#allocation6], 256, 256, 16
    $region9: #{tpu_custom_call.1} parent=1 // pred_fallthru
      _
    // Predicated region
    $region10: #{tpu_custom_call.1} parent=1 // pred_check
      _
    $region11: #{tpu_custom_call.1} parent=1 // pred_check_branch
      %36 = sbr.rel (0) target = $region13
    $region12: #{tpu_custom_call.1} parent=1 // pred_region
      _
    $region13: #{tpu_custom_call.1} parent=1 // pred_fallthru
      _
    // Predicated region
    $region14: #{tpu_custom_call.1} parent=1 // pred_check
      _
    $region15: #{tpu_custom_call.1} parent=1 // pred_check_branch
      %38 = sbr.rel (0) target = $region17
    $region16: #{tpu_custom_call.1} parent=1 // pred_region
      %39 = dma.done [#allocation3], 512
    $region17: #{tpu_custom_call.1} parent=1 // pred_fallthru
      _
    // Predicated region
    $region18: #{tpu_custom_call.1} parent=1 // pred_check
      _
    $region19: #{tpu_custom_call.1} parent=1 // pred_check_branch
      %41 = sbr.rel (0) target = $region21
    $region20: #{tpu_custom_call.1} parent=1 // pred_region
      %42 = dma.done [#allocation6], 4096
    $region21: #{tpu_custom_call.1} parent=1 // pred_fallthru
      _
    %v43 = vld [vmem:[#allocation2] sm:$0xff]
    %v44 = vld [vmem:[#allocation2 + $0x8] sm:$0xff]
    %v45 = vld [vmem:[#allocation2 + $0x10] sm:$0xff]
    %v46 = vld [vmem:[#allocation2 + $0x18] sm:$0xff]
    %v47 = vld [vmem:[#allocation5] sm:$0xff]
    %v48 = vld [vmem:[#allocation5 + $0x8] sm:$0xff]
    %v49 = vld [vmem:[#allocation5 + $0x10] sm:$0xff]
    %v50 = vld [vmem:[#allocation5 + $0x18] sm:$0xff]
    %v51 = vld [vmem:[#allocation5 + $0x20] sm:$0xff]
    %v52 = vld [vmem:[#allocation5 + $0x28] sm:$0xff]
    %v53 = vld [vmem:[#allocation5 + $0x30] sm:$0xff]
    %v54 = vld [vmem:[#allocation5 + $0x38] sm:$0xff]
    %v55 = vld [vmem:[#allocation5 + $0x40] sm:$0xff]
    %v56 = vld [vmem:[#allocation5 + $0x48] sm:$0xff]
    %v57 = vld [vmem:[#allocation5 + $0x50] sm:$0xff]
    %v58 = vld [vmem:[#allocation5 + $0x58] sm:$0xff]
    %v59 = vld [vmem:[#allocation5 + $0x60] sm:$0xff]
    %v60 = vld [vmem:[#allocation5 + $0x68] sm:$0xff]
    %v61 = vld [vmem:[#allocation5 + $0x70] sm:$0xff]
    %v62 = vld [vmem:[#allocation5 + $0x78] sm:$0xff]
    %v63 = vld [vmem:[#allocation5 + $0x80] sm:$0xff]
    %v64 = vld [vmem:[#allocation5 + $0x88] sm:$0xff]
    %v65 = vld [vmem:[#allocation5 + $0x90] sm:$0xff]
    %v66 = vld [vmem:[#allocation5 + $0x98] sm:$0xff]
    %v67 = vld [vmem:[#allocation5 + $0xa0] sm:$0xff]
    %v68 = vld [vmem:[#allocation5 + $0xa8] sm:$0xff]
    %v69 = vld [vmem:[#allocation5 + $0xb0] sm:$0xff]
    %v70 = vld [vmem:[#allocation5 + $0xb8] sm:$0xff]
    %v71 = vld [vmem:[#allocation5 + $0xc0] sm:$0xff]
    %v72 = vld [vmem:[#allocation5 + $0xc8] sm:$0xff]
    %v73 = vld [vmem:[#allocation5 + $0xd0] sm:$0xff]
    %v74 = vld [vmem:[#allocation5 + $0xd8] sm:$0xff]
    %v75 = vld [vmem:[#allocation5 + $0xe0] sm:$0xff]
    %v76 = vld [vmem:[#allocation5 + $0xe8] sm:$0xff]
    %v77 = vld [vmem:[#allocation5 + $0xf0] sm:$0xff]
    %v78 = vld [vmem:[#allocation5 + $0xf8] sm:$0xff]
    %v79 = vld [vmem:[%s2] sm:$0x3]
    %v81 = vlaneseq
    %v82 = vshrl.u32 %v81, 7
    %v83 = vsub.s32 0, %v82
    %v84 = vrot.slane %v79, %v83
    %v85 = vlaneseq
    %v86 = vshrl.u32 %v85, 7
    %v87 = vsub.s32 1, %v86
    %v88 = vrot.slane %v79, %v87
    %91 = vmatprep.subr.mxu0 %v48
    %92 = vmatpush1.msra.mxu0 %v47
    %93 = vmatprep.subr.mxu0 %v50
    %94 = vmatpush1.msra.mxu0 %v49
    %95 = vmatprep.subr.mxu0 %v52
    %96 = vmatpush1.msra.mxu0 %v51
    %97 = vmatprep.subr.mxu0 %v54
    %98 = vmatpush1.msra.mxu0 %v53
    %99 = vmatprep.subr.mxu0 %v56
    %100 = vmatpush1.msra.mxu0 %v55
    %101 = vmatprep.subr.mxu0 %v58
    %102 = vmatpush1.msra.mxu0 %v57
    %103 = vmatprep.subr.mxu0 %v60
    %104 = vmatpush1.msra.mxu0 %v59
    %105 = vmatprep.subr.mxu0 %v62
    %106 = vmatpush1.msra.mxu0 %v61
    %107 = vmatprep.subr.mxu0 %v64
    %108 = vmatpush1.msra.mxu0 %v63
    %109 = vmatprep.subr.mxu0 %v66
    %110 = vmatpush1.msra.mxu0 %v65
    %111 = vmatprep.subr.mxu0 %v68
    %112 = vmatpush1.msra.mxu0 %v67
    %113 = vmatprep.subr.mxu0 %v70
    %114 = vmatpush1.msra.mxu0 %v69
    %115 = vmatprep.subr.mxu0 %v72
    %116 = vmatpush1.msra.mxu0 %v71
    %117 = vmatprep.subr.mxu0 %v74
    %118 = vmatpush1.msra.mxu0 %v73
    %119 = vmatprep.subr.mxu0 %v76
    %120 = vmatpush1.msra.mxu0 %v75
    %121 = vmatprep.subr.mxu0 %v78
    %122 = vmatpush1.msra.mxu0 %v77
    %123 = vmatprep.subr.mxu0 0.0
    %124 = vmatpush1.msra.mxu0 0.0
    %125 = vmatprep.subr.mxu0 0.0
    %126 = vmatpush1.msra.mxu0 0.0
    %127 = vmatprep.subr.mxu0 0.0
    %128 = vmatpush1.msra.mxu0 0.0
    %129 = vmatprep.subr.mxu0 0.0
    %130 = vmatpush1.msra.mxu0 0.0
    %131 = vmatprep.subr.mxu0 0.0
    %132 = vmatpush1.msra.mxu0 0.0
    %133 = vmatprep.subr.mxu0 0.0
    %134 = vmatpush1.msra.mxu0 0.0
    %135 = vmatprep.subr.mxu0 0.0
    %136 = vmatpush1.msra.mxu0 0.0
    %137 = vmatprep.subr.mxu0 0.0
    %138 = vmatpush1.msra.mxu0 0.0
    %139 = vmatprep.subr.mxu0 0.0
    %140 = vmatpush1.msra.mxu0 0.0
    %141 = vmatprep.subr.mxu0 0.0
    %142 = vmatpush1.msra.mxu0 0.0
    %143 = vmatprep.subr.mxu0 0.0
    %144 = vmatpush1.msra.mxu0 0.0
    %145 = vmatprep.subr.mxu0 0.0
    %146 = vmatpush1.msra.mxu0 0.0
    %147 = vmatprep.subr.mxu0 0.0
    %148 = vmatpush1.msra.mxu0 0.0
    %149 = vmatprep.subr.mxu0 0.0
    %150 = vmatpush1.msra.mxu0 0.0
    %151 = vmatprep.subr.mxu0 0.0
    %152 = vmatpush1.msra.mxu0 0.0
    %153 = vmatprep.subr.mxu0 0.0
    %154 = vmatpush1.msra.mxu0 0.0
    %155 = vmatprep.mubr.f32.mxu0 0.0
    %156 = vmatmul.mubr.f32.gmra.mrb[0].mxu0 %v43
    %v157 = vpop.f32.mrb[0].mxu0
    %v158 = vadd.f32 %v84, %v157
    %v159 = vpop.f32.mrb[0].mxu0
    %v160 = vadd.f32 %v88, %v159
    %161 = vmatprep.mubr.f32.mxu0 0.0
    %162 = vmatmul.mubr.f32.gmra.mrb[0].mxu0 %v44
    %v163 = vpop.f32.mrb[0].mxu0
    %v164 = vadd.f32 %v84, %v163
    %v165 = vpop.f32.mrb[0].mxu0
    %v166 = vadd.f32 %v88, %v165
    %167 = vmatprep.mubr.f32.mxu0 0.0
    %168 = vmatmul.mubr.f32.gmra.mrb[0].mxu0 %v45
    %v169 = vpop.f32.mrb[0].mxu0
    %v170 = vadd.f32 %v84, %v169
    %v171 = vpop.f32.mrb[0].mxu0
    %v172 = vadd.f32 %v88, %v171
    %173 = vmatprep.mubr.f32.mxu0 0.0
    %174 = vmatmul.mubr.f32.gmra.mrb[0].mxu0 %v46
    %v175 = vpop.f32.mrb[0].mxu0
    %v176 = vadd.f32 %v84, %v175
    %v177 = vpop.f32.mrb[0].mxu0
    %v178 = vadd.f32 %v88, %v177
    %179 = vdwg.mxu0
    %180 = vst [vmem:[#allocation7] sm:$0xff] %v158
    %181 = vst [vmem:[#allocation7 + $0x8] sm:$0xff] %v160
    %182 = vst [vmem:[#allocation7 + $0x10] sm:$0xff] %v164
    %183 = vst [vmem:[#allocation7 + $0x18] sm:$0xff] %v166
    %184 = vst [vmem:[#allocation7 + $0x20] sm:$0xff] %v170
    %185 = vst [vmem:[#allocation7 + $0x28] sm:$0xff] %v172
    %186 = vst [vmem:[#allocation7 + $0x30] sm:$0xff] %v176
    %187 = vst [vmem:[#allocation7 + $0x38] sm:$0xff] %v178
    // Predicated region
    $region22: #{tpu_custom_call.1} parent=1 // pred_check
      _
    $region23: #{tpu_custom_call.1} parent=1 // pred_check_branch
      %189 = sbr.rel (0) target = $region25
    $region24: #{tpu_custom_call.1} parent=1 // pred_region
      %s191 = ssub.s32 1024, 1024
      %192 = vsyncadd [#allocation4], %s191
      %s193 = sshll.u32 [#allocation7], 4
      %s194 = int_to_ptr.vmem [resolvable:$true] %s193
      %199 = dma.vmem_to_hbm [thread:$0]  %s194, 1024, %s3, [#allocation4], 256, 256, 16
    $region25: #{tpu_custom_call.1} parent=1 // pred_fallthru
      _
    // Predicated region
    $region26: #{tpu_custom_call.1} parent=1 // pred_check
      _
    $region27: #{tpu_custom_call.1} parent=1 // pred_check_branch
      %201 = sbr.rel (0) target = $region29
    $region28: #{tpu_custom_call.1} parent=1 // pred_region
      %202 = dma.done [#allocation4], 1024
    $region29: #{tpu_custom_call.1} parent=1 // pred_fallthru
      _
    %203 = vsyncpa [#allocation3], 1
    %204 = vsyncpa [#allocation6], 1
    %205 = vsyncpa [#allocation4], 1

</llo_original>
